<compile_context>
chip_gen: v6e
topology: v6e:2x2x1
jax: 0.10.0
libtpu: 0.0.40
codegen_flags: <defaults>
</compile_context>

<pallas_src>
import jax
import jax.numpy as jnp
from jax import lax
from jax.experimental import pallas as pl
from jax.experimental.pallas import tpu as pltpu


def _round_up(a: int, b: int) -> int:
    return ((a + b - 1) // b) * b


def _cdiv(a: int, b: int) -> int:
    return (a + b - 1) // b


def _gaussian_rbf_kernel(sigma_ref, x_ref, y_ref, x2_ref, y2_ref, o_ref):
    """Grid: (i over Nx tiles, j over Ny tiles, k over feature tiles)."""
    k = pl.program_id(2)
    nk = pl.num_programs(2)

    # x @ y^T partial product, contracting the last dim of both tiles so the
    # MXU consumes y's tile directly (no XLU transpose). f32 accumulation.
    prod = lax.dot_general(
        x_ref[...],
        y_ref[...],
        dimension_numbers=(((1,), (1,)), ((), ())),
        preferred_element_type=jnp.float32,
    )

    @pl.when(k == 0)
    def _():
        o_ref[...] = prod          # direct store: no zero-init + extra RMW pass

    @pl.when(k > 0)
    def _():
        o_ref[...] += prod

    @pl.when(k == nk - 1)
    def _():
        xy = o_ref[...]                                    # [tm, tn] f32
        dist = x2_ref[...] + y2_ref[...] - 2.0 * xy        # (tm,1)+(1,tn) bcast
        dist = jnp.maximum(dist, 1e-30)                    # clamp_min_(1e-30)

        n_sigma = sigma_ref.shape[0]                       # static, small
        s0 = sigma_ref[0]                                  # scalar from SMEM
        neg_g0 = -1.0 / (2.0 * s0 * s0)
        ksum = jnp.exp(neg_g0 * dist)                      # init with first term
        for s in range(1, n_sigma):
            sig = sigma_ref[s]
            neg_g = -1.0 / (2.0 * sig * sig)
            ksum = ksum + jnp.exp(neg_g * dist)
        o_ref[...] = ksum * (1.0 / float(n_sigma))


def gaussian_rbf(x, y, log_sigma, *, tm=None, tn=None, tk=None, cast_to_bf16=False):
    """GaussianRBF.forward(x, y) with a fixed (deterministic) sigma parameter.

    x, y: arrays of shape [N, ...] (flattened on axis 1, like torch flatten(1)).
    log_sigma: 1-D array of log-bandwidths (the nn.Parameter of the module).
    cast_to_bf16: optionally stream f32 inputs as bf16 into the MXU (faster on
                  v6e/v7x; slightly looser numerics vs. the torch f32 reference).
    Returns the [Nx, Ny] float32 kernel matrix (mean over bandwidths).
    """
    xf = x.reshape(x.shape[0], -1)
    yf = y.reshape(y.shape[0], -1)

    # Streamed operand dtype: keep bf16 if given bf16 (or requested), else f32
    # to match the torch reference numerics.
    if cast_to_bf16 or (xf.dtype == jnp.bfloat16 and yf.dtype == jnp.bfloat16):
        cdtype = jnp.bfloat16
    else:
        cdtype = jnp.float32
    xf = xf.astype(cdtype)
    yf = yf.astype(cdtype)
    itemsize = jnp.dtype(cdtype).itemsize

    Nx, F = xf.shape
    Ny, Fy = yf.shape
    assert F == Fy, "x and y must have the same feature dimension"

    # Generation-tuned tile caps / VMEM limits.
    try:
        kind = jax.devices()[0].device_kind.lower()
    except Exception:  # pragma: no cover - defensive
        kind = ""
    if "v7" in kind or "7x" in kind:
        tm_cap, tn_cap, vmem_cap = 512, 512, 48 << 20      # 64 MiB physical VMEM
    elif "v6" in kind:
        tm_cap, tn_cap, vmem_cap = 1024, 1024, 100 << 20   # needs high intensity
    else:  # v5e / unknown
        tm_cap, tn_cap, vmem_cap = 512, 512, 100 << 20
    tk_cap = 4096 if itemsize == 2 else 2048

    tm = tm_cap if tm is None else tm
    tn = tn_cap if tn is None else tn
    tk = tk_cap if tk is None else tk

    # Adaptive tiling: full-dim tiles whenever they fit (no padding, single
    # streaming pass over the other operand); otherwise aligned tiles.
    if Nx <= tm:
        tm = Nx                                # full dim: no 8-alignment needed
    else:
        tm = max(8, (tm // 8) * 8)             # second-to-last dim of x / out
    if Ny <= tn:
        tn = Ny                                # full dim: no 128-alignment needed
    else:
        tn = max(128, (tn // 128) * 128)       # lane-dense output stores
    if F <= tk:
        tk = F                                 # collapse k axis: one step, x not
                                               # re-streamed per j tile
    else:
        tk = max(128, (tk // 128) * 128)
        if F % tk != 0:
            # TODO(synk): rare fallback — a ragged feature tail would corrupt the
            # contraction, so pad the feature dim only (one extra HBM copy).
            Fp = _round_up(F, tk)
            xf = jnp.pad(xf, ((0, 0), (0, Fp - F)))
            yf = jnp.pad(yf, ((0, 0), (0, Fp - F)))
            F = Fp

    # v7x has 2 TensorCores: make sure a single-output-tile grid is split so
    # both cores get a parallel tile (only worth it for non-trivial sizes).
    if ("v7" in kind or "7x" in kind) and _cdiv(Nx, tm) * _cdiv(Ny, tn) == 1:
        if Nx >= 16:
            tm = _round_up(_cdiv(Nx, 2), 8)
        elif Ny >= 256:
            tn = _round_up(_cdiv(Ny, 2), 128)

    # Precompute squared norms once (tiny XLA ops; avoids per-(i,j) rework).
    x2 = jnp.sum(xf.astype(jnp.float32) ** 2, axis=-1, keepdims=True)       # [Nx, 1]
    y2 = jnp.sum(yf.astype(jnp.float32) ** 2, axis=-1, keepdims=True).T     # [1, Ny]

    sigma = jnp.exp(jnp.asarray(log_sigma, jnp.float32).reshape(-1))  # self.sigma

    grid = (_cdiv(Nx, tm), _cdiv(Ny, tn), _cdiv(F, tk))

    # VMEM estimate with lane/sublane padding of the small norm tiles included.
    vmem_bytes = (
        2 * _round_up(tm, 8) * _round_up(tk, 128) * itemsize     # x tiles (dbl buf)
        + 2 * _round_up(tn, 8) * _round_up(tk, 128) * itemsize   # y tiles
        + 2 * _round_up(tm, 8) * 128 * 4                         # ||x||^2 (lane pad)
        + 2 * 8 * _round_up(tn, 128) * 4                         # ||y||^2 (sublane pad)
        + 2 * _round_up(tm, 8) * _round_up(tn, 128) * 4          # output tile
        + (4 << 20)                                              # headroom
    )
    vmem_bytes = min(vmem_bytes, vmem_cap)

    out = pl.pallas_call(
        _gaussian_rbf_kernel,
        out_shape=jax.ShapeDtypeStruct((Nx, Ny), jnp.float32),
        grid_spec=pltpu.PrefetchScalarGridSpec(
            num_scalar_prefetch=1,  # sigma vector lives in SMEM
            grid=grid,
            in_specs=[
                pl.BlockSpec((tm, tk), lambda i, j, k, sig: (i, k)),  # x
                pl.BlockSpec((tn, tk), lambda i, j, k, sig: (j, k)),  # y
                pl.BlockSpec((tm, 1), lambda i, j, k, sig: (i, 0)),   # ||x||^2
                pl.BlockSpec((1, tn), lambda i, j, k, sig: (0, j)),   # ||y||^2
            ],
            out_specs=pl.BlockSpec((tm, tn), lambda i, j, k, sig: (i, j)),
        ),
        compiler_params=pltpu.CompilerParams(
            dimension_semantics=("parallel", "parallel", "arbitrary"),
            vmem_limit_bytes=int(vmem_bytes),
        ),
    )(sigma, xf, yf, x2, y2)

    return out


def _reference(x, y, log_sigma):
    xf = x.reshape(x.shape[0], -1).astype(jnp.float32)
    yf = y.reshape(y.shape[0], -1).astype(jnp.float32)
    x2 = jnp.sum(xf * xf, axis=-1, keepdims=True)
    y2 = jnp.sum(yf * yf, axis=-1, keepdims=True)
    dist = jnp.clip(x2 + y2.T - 2.0 * xf @ yf.T, 1e-30)
    sigma = jnp.exp(jnp.asarray(log_sigma, jnp.float32).reshape(-1))
    gamma = 1.0 / (2.0 * sigma**2)
    return jnp.mean(jnp.exp(-gamma[:, None, None] * dist[None]), axis=0)


if __name__ == "__main__":
    key = jax.random.PRNGKey(0)
    kx, ky = jax.random.split(key)

    # Batches of image-like instances (NCHW); forward flattens to [N, C*H*W].
    x = jax.random.normal(kx, (8, 4, 8, 8), dtype=jnp.float32)   # Nx=8, F=256
    y = jax.random.normal(ky, (6, 4, 8, 8), dtype=jnp.float32)   # Ny=6, F=256

    # Deterministic parameter init: sigma given at construction -> log_sigma = log(sigma).
    sigma_init = jnp.array([0.75, 1.5], dtype=jnp.float32)
    log_sigma = jnp.log(sigma_init)

    out = gaussian_rbf(x, y, log_sigma)
    out = jax.block_until_ready(out)

    ref = _reference(x, y, log_sigma)
    assert out.shape == (8, 6) and out.dtype == jnp.float32
    assert jnp.allclose(out, ref, rtol=1e-5, atol=1e-5), "mismatch vs reference"

    print("KERNEL_OK")
</pallas_src>

<mosaic_0001>
module attributes {stable_mosaic.version = 11 : i64} {
  func.func @_gaussian_rbf_kernel(%arg0: i32, %arg1: i32, %arg2: i32, %arg3: memref<2xf32, #tpu.memory_space<smem>>, %arg4: memref<8x256xf32, #tpu.memory_space<vmem>>, %arg5: memref<6x256xf32, #tpu.memory_space<vmem>>, %arg6: memref<8x1xf32, #tpu.memory_space<vmem>>, %arg7: memref<1x6xf32, #tpu.memory_space<vmem>>, %arg8: memref<8x6xf32, #tpu.memory_space<vmem>>) attributes {dimension_semantics = [#tpu.dimension_semantics<parallel>, #tpu.dimension_semantics<parallel>, #tpu.dimension_semantics<arbitrary>], iteration_bounds = array<i64: 1, 1, 1>, scalar_prefetch = 1 : i64, scratch_operands = 0 : i64, tpu.core_type = #tpu.core_type<tc>, window_params = [{transform_indices = @transform_0, window_bounds = array<i64: 8, 256>}, {transform_indices = @transform_1, window_bounds = array<i64: 6, 256>}, {transform_indices = @transform_2, window_bounds = array<i64: 8, 1>}, {transform_indices = @transform_3, window_bounds = array<i64: 1, 6>}, {transform_indices = @transform_4, window_bounds = array<i64: 8, 6>}]} {
    %c0 = arith.constant 0 : index
    %c0_0 = arith.constant 0 : index
    %0 = vector.load %arg4[%c0, %c0_0] : memref<8x256xf32, #tpu.memory_space<vmem>>, vector<8x256xf32>
    %c0_1 = arith.constant 0 : index
    %c0_2 = arith.constant 0 : index
    %1 = vector.load %arg5[%c0_1, %c0_2] : memref<6x256xf32, #tpu.memory_space<vmem>>, vector<6x256xf32>
    %cst = arith.constant dense<0.000000e+00> : vector<8x6xf32>
    %2 = tpu.matmul %0, %1, %cst {dimension_numbers = #tpu.dot_dimension_numbers<[1], [1], [0], [0], [0, 0, 1, 0], [], []>} : vector<8x256xf32>, vector<6x256xf32>, vector<8x6xf32> -> vector<8x6xf32>
    %c0_i32 = arith.constant 0 : i32
    %3 = arith.cmpi eq, %arg2, %c0_i32 : i32
    %4 = arith.extui %3 : i1 to i32
    %c0_i32_3 = arith.constant 0 : i32
    %5 = arith.cmpi ne, %4, %c0_i32_3 : i32
    scf.if %5 {
      %c0_8 = arith.constant 0 : index
      %c0_9 = arith.constant 0 : index
      %12 = vector.load %arg8[%c0_8, %c0_9] : memref<8x6xf32, #tpu.memory_space<vmem>>, vector<8x6xf32>
      tpu.vector_store %arg8[%c0_8, %c0_9], %2 {strides = array<i32>} : memref<8x6xf32, #tpu.memory_space<vmem>>, vector<8x6xf32>,
    } else {
    }
    %c0_i32_4 = arith.constant 0 : i32
    %6 = arith.cmpi sgt, %arg2, %c0_i32_4 : i32
    %7 = arith.extui %6 : i1 to i32
    %c0_i32_5 = arith.constant 0 : i32
    %8 = arith.cmpi ne, %7, %c0_i32_5 : i32
    scf.if %8 {
      %c0_8 = arith.constant 0 : index
      %c0_9 = arith.constant 0 : index
      %12 = vector.load %arg8[%c0_8, %c0_9] : memref<8x6xf32, #tpu.memory_space<vmem>>, vector<8x6xf32>
      %13 = arith.addf %12, %2 : vector<8x6xf32>
      %c0_10 = arith.constant 0 : index
      %c0_11 = arith.constant 0 : index
      %14 = vector.load %arg8[%c0_10, %c0_11] : memref<8x6xf32, #tpu.memory_space<vmem>>, vector<8x6xf32>
      tpu.vector_store %arg8[%c0_10, %c0_11], %13 {strides = array<i32>} : memref<8x6xf32, #tpu.memory_space<vmem>>, vector<8x6xf32>,
    } else {
    }
    %c0_i32_6 = arith.constant 0 : i32
    %9 = arith.cmpi eq, %arg2, %c0_i32_6 : i32
    %10 = arith.extui %9 : i1 to i32
    %c0_i32_7 = arith.constant 0 : i32
    %11 = arith.cmpi ne, %10, %c0_i32_7 : i32
    scf.if %11 {
      %c0_8 = arith.constant 0 : index
      %c0_9 = arith.constant 0 : index
      %12 = vector.load %arg8[%c0_8, %c0_9] : memref<8x6xf32, #tpu.memory_space<vmem>>, vector<8x6xf32>
      %c0_10 = arith.constant 0 : index
      %c0_11 = arith.constant 0 : index
      %13 = vector.load %arg6[%c0_10, %c0_11] : memref<8x1xf32, #tpu.memory_space<vmem>>, vector<8x1xf32>
      %c0_12 = arith.constant 0 : index
      %c0_13 = arith.constant 0 : index
      %14 = vector.load %arg7[%c0_12, %c0_13] : memref<1x6xf32, #tpu.memory_space<vmem>>, vector<1x6xf32>
      %15 = vector.broadcast %13 : vector<8x1xf32> to vector<8x6xf32>
      %16 = vector.broadcast %14 : vector<1x6xf32> to vector<8x6xf32>
      %17 = arith.addf %15, %16 : vector<8x6xf32>
      %cst_14 = arith.constant 2.000000e+00 : f32
      %18 = vector.broadcast %cst_14 : f32 to vector<8x6xf32>
      %19 = arith.mulf %18, %12 : vector<8x6xf32>
      %20 = arith.subf %17, %19 : vector<8x6xf32>
      %cst_15 = arith.constant 1.000000e-30 : f32
      %21 = vector.broadcast %cst_15 : f32 to vector<8x6xf32>
      %22 = arith.maximumf %20, %21 : vector<8x6xf32>
      %c0_16 = arith.constant 0 : index
      %23 = memref.load %arg3[%c0_16] : memref<2xf32, #tpu.memory_space<smem>>
      %cst_17 = arith.constant 2.000000e+00 : f32
      %24 = arith.mulf %cst_17, %23 : f32
      %25 = arith.mulf %24, %23 : f32
      %cst_18 = arith.constant -1.000000e+00 : f32
      %26 = arith.divf %cst_18, %25 : f32
      %27 = vector.broadcast %26 : f32 to vector<8x6xf32>
      %28 = arith.mulf %27, %22 : vector<8x6xf32>
      %29 = math.exp %28 : vector<8x6xf32>
      %c1 = arith.constant 1 : index
      %30 = memref.load %arg3[%c1] : memref<2xf32, #tpu.memory_space<smem>>
      %cst_19 = arith.constant 2.000000e+00 : f32
      %31 = arith.mulf %cst_19, %30 : f32
      %32 = arith.mulf %31, %30 : f32
      %cst_20 = arith.constant -1.000000e+00 : f32
      %33 = arith.divf %cst_20, %32 : f32
      %34 = vector.broadcast %33 : f32 to vector<8x6xf32>
      %35 = arith.mulf %34, %22 : vector<8x6xf32>
      %36 = math.exp %35 : vector<8x6xf32>
      %37 = arith.addf %29, %36 : vector<8x6xf32>
      %cst_21 = arith.constant 5.000000e-01 : f32
      %38 = vector.broadcast %cst_21 : f32 to vector<8x6xf32>
      %39 = arith.mulf %37, %38 : vector<8x6xf32>
      %c0_22 = arith.constant 0 : index
      %c0_23 = arith.constant 0 : index
      %40 = vector.load %arg8[%c0_22, %c0_23] : memref<8x6xf32, #tpu.memory_space<vmem>>, vector<8x6xf32>
      tpu.vector_store %arg8[%c0_22, %c0_23], %39 {strides = array<i32>} : memref<8x6xf32, #tpu.memory_space<vmem>>, vector<8x6xf32>,
    } else {
    }
    return
  }
  func.func @transform_0(%arg0: i32, %arg1: i32, %arg2: i32, %arg3: memref<2xf32, #tpu.memory_space<smem>>) -> (i32, i32) {
    %c0_i32 = arith.constant 0 : i32
    return %arg0, %arg2 : i32, i32
  }
  func.func @transform_1(%arg0: i32, %arg1: i32, %arg2: i32, %arg3: memref<2xf32, #tpu.memory_space<smem>>) -> (i32, i32) {
    %c0_i32 = arith.constant 0 : i32
    return %arg1, %arg2 : i32, i32
  }
  func.func @transform_2(%arg0: i32, %arg1: i32, %arg2: i32, %arg3: memref<2xf32, #tpu.memory_space<smem>>) -> (i32, i32) {
    %c0_i32 = arith.constant 0 : i32
    %c0_i32_0 = arith.constant 0 : i32
    return %arg0, %c0_i32 : i32, i32
  }
  func.func @transform_3(%arg0: i32, %arg1: i32, %arg2: i32, %arg3: memref<2xf32, #tpu.memory_space<smem>>) -> (i32, i32) {
    %c0_i32 = arith.constant 0 : i32
    %c0_i32_0 = arith.constant 0 : i32
    return %c0_i32, %arg1 : i32, i32
  }
  func.func @transform_4(%arg0: i32, %arg1: i32, %arg2: i32, %arg3: memref<2xf32, #tpu.memory_space<smem>>) -> (i32, i32) {
    %c0_i32 = arith.constant 0 : i32
    return %arg0, %arg1 : i32, i32
  }
}

</mosaic_0001>

<llo_original>
// kernel: tpu_custom_call.1
$region0: #{tpu_custom_call.1}
  #allocation0 [shape = 'u32[]', space=smem, size = 0x4, offset = 0x4, fixed_abs, tag = 'smem constant byte address 0x4 - core index']
  #allocation1 [shape = 'u32[144,128]{1,0:T(1,128)}', space=vmem, size = 0x12000, scoped, tag = 'internal scratch']
  #allocation2 [shape = 's32[1]{0}', space=sflag, size = 0x4, scoped, tag = 'scoped memory for tpu_custom_call.1']
  #allocation3 [shape = 'u8[512]{0}', space=smem, size = 0x200, scoped, tag = 'prefetched SMEM operand 0']
  %s0 = inlined_call_operand.vmem [shape: f32[2], index: 0, kind: input, shape index: {}]
  %s1 = inlined_call_operand.hbm [shape: f32[8,256], index: 1, kind: input, shape index: {}]
  %s2 = inlined_call_operand.hbm [shape: f32[6,256], index: 2, kind: input, shape index: {}]
  %s3 = inlined_call_operand.vmem [shape: f32[8,1], index: 3, kind: input, shape index: {}]
  %s4 = inlined_call_operand.vmem [shape: f32[1,6], index: 4, kind: input, shape index: {}]
  %s5 = inlined_call_operand.hbm [shape: f32[8,6], index: 5, kind: output, shape index: {}]
  %s6 = sld [smem:[#allocation0]]
  $region46: #{tpu_custom_call.1} parent=0
    _
  %s8 = ssub.s32 1, %s6
  %s9 = scalar_select 0, %s8, %s6
  %s10 = sshll.u32 %s0, 4
  %s11 = int_to_ptr.vmem [resolvable:$true] %s10
  %13 = dma.vmem_to_smem %s11, 16, [#allocation3], [#allocation2]
  %14 = dma.done [#allocation2], 16
  %15 = sfence
  $region1: #{tpu_custom_call.1} parent=0
    #allocation4 [shape = 'u8[8192]{0}', space=vmem, size = 0x2000, scoped, tag = 'input window, operand 1, single buffered']
    #allocation5 [shape = 's32[1]{0}', space=sflag, size = 0x4, scoped, tag = 'scoped memory for tpu_custom_call.1']
    #allocation6 [shape = 's32[1]{0}', space=sflag, size = 0x4, scoped, tag = 'scoped memory for tpu_custom_call.1']
    #allocation7 [shape = 'u8[8192]{0}', space=vmem, size = 0x2000, scoped, tag = 'input window, operand 2, single buffered']
    #allocation8 [shape = 's32[1]{0}', space=sflag, size = 0x4, scoped, tag = 'scoped memory for tpu_custom_call.1']
    #allocation9 [shape = 'u8[4096]{0}', space=vmem, size = 0x1000, scoped, tag = 'output window, operand 0, single buffered']
    %16 = vsyncpa [#allocation5], 0
    %17 = vsyncpa [#allocation8], 0
    %18 = vsyncpa [#allocation6], 0
    // Predicated region
    $region2: #{tpu_custom_call.1} parent=1 // pred_check
      _
    $region3: #{tpu_custom_call.1} parent=1 // pred_check_branch
      %20 = sbr.rel (0) target = $region5
    $region4: #{tpu_custom_call.1} parent=1 // pred_region
      %s22 = ssub.s32 256, 256
      %23 = vsyncadd [#allocation5], %s22
      %s25 = sshll.u32 [#allocation4], 4
      %s26 = int_to_ptr.vmem [resolvable:$true] %s25
      %28 = dma.hbm_to_vmem [thread:$0]  %s1, 256, %s26, [#allocation5]
    $region5: #{tpu_custom_call.1} parent=1 // pred_fallthru
      _
    // Predicated region
    $region6: #{tpu_custom_call.1} parent=1 // pred_check
      _
    $region7: #{tpu_custom_call.1} parent=1 // pred_check_branch
      %30 = sbr.rel (0) target = $region9
    $region8: #{tpu_custom_call.1} parent=1 // pred_region
      %s32 = ssub.s32 256, 256
      %33 = vsyncadd [#allocation8], %s32
      %s35 = sshll.u32 [#allocation7], 4
      %s36 = int_to_ptr.vmem [resolvable:$true] %s35
      %38 = dma.hbm_to_vmem [thread:$0]  %s2, 256, %s36, [#allocation8]
    $region9: #{tpu_custom_call.1} parent=1 // pred_fallthru
      _
    // Predicated region
    $region10: #{tpu_custom_call.1} parent=1 // pred_check
      _
    $region11: #{tpu_custom_call.1} parent=1 // pred_check_branch
      %40 = sbr.rel (0) target = $region13
    $region12: #{tpu_custom_call.1} parent=1 // pred_region
      _
    $region13: #{tpu_custom_call.1} parent=1 // pred_fallthru
      _
    // Predicated region
    $region14: #{tpu_custom_call.1} parent=1 // pred_check
      _
    $region15: #{tpu_custom_call.1} parent=1 // pred_check_branch
      %42 = sbr.rel (0) target = $region17
    $region16: #{tpu_custom_call.1} parent=1 // pred_region
      _
    $region17: #{tpu_custom_call.1} parent=1 // pred_fallthru
      _
    // Predicated region
    $region18: #{tpu_custom_call.1} parent=1 // pred_check
      _
    $region19: #{tpu_custom_call.1} parent=1 // pred_check_branch
      %44 = sbr.rel (0) target = $region21
    $region20: #{tpu_custom_call.1} parent=1 // pred_region
      %45 = dma.done [#allocation5], 256
    $region21: #{tpu_custom_call.1} parent=1 // pred_fallthru
      _
    // Predicated region
    $region22: #{tpu_custom_call.1} parent=1 // pred_check
      _
    $region23: #{tpu_custom_call.1} parent=1 // pred_check_branch
      %47 = sbr.rel (0) target = $region25
    $region24: #{tpu_custom_call.1} parent=1 // pred_region
      %48 = dma.done [#allocation8], 256
    $region25: #{tpu_custom_call.1} parent=1 // pred_fallthru
      _
    %v49 = vld [vmem:[#allocation4] sm:$0xff]
    %v50 = vld [vmem:[#allocation4 + $0x8] sm:$0xff]
    %v51 = vld [vmem:[#allocation7] sm:$0x3f]
    %v52 = vld [vmem:[#allocation7 + $0x8] sm:$0x3f]
    %53 = vmatprep.subr.mxu0 0.0
    %54 = vmatpush1.xpose.msra.mxu0 0.0
    %55 = vmatprep.subr.mxu0 0.0
    %56 = vmatpush1.xpose.msra.mxu0 0.0
    %57 = vmatprep.subr.mxu0 0.0
    %58 = vmatpush1.xpose.msra.mxu0 0.0
    %59 = vmatprep.subr.mxu0 0.0
    %60 = vmatpush1.xpose.msra.mxu0 0.0
    %61 = vmatprep.subr.mxu0 0.0
    %62 = vmatpush1.xpose.msra.mxu0 0.0
    %63 = vmatprep.subr.mxu0 0.0
    %64 = vmatpush1.xpose.msra.mxu0 0.0
    %65 = vmatprep.subr.mxu0 0.0
    %66 = vmatpush1.xpose.msra.mxu0 0.0
    %67 = vmatprep.subr.mxu0 0.0
    %68 = vmatpush1.xpose.msra.mxu0 0.0
    %69 = vmatprep.subr.mxu0 0.0
    %70 = vmatpush1.xpose.msra.mxu0 0.0
    %71 = vmatprep.subr.mxu0 0.0
    %72 = vmatpush1.xpose.msra.mxu0 0.0
    %73 = vmatprep.subr.mxu0 0.0
    %74 = vmatpush1.xpose.msra.mxu0 0.0
    %75 = vmatprep.subr.mxu0 0.0
    %76 = vmatpush1.xpose.msra.mxu0 0.0
    %77 = vmatprep.subr.mxu0 0.0
    %78 = vmatpush1.xpose.msra.mxu0 0.0
    %79 = vmatprep.subr.mxu0 0.0
    %80 = vmatpush1.xpose.msra.mxu0 0.0
    %81 = vmatprep.subr.mxu0 0.0
    %82 = vmatpush1.xpose.msra.mxu0 0.0
    %83 = vmatprep.subr.mxu0 %v52
    %84 = vmatpush1.xpose.msra.mxu0 %v51
    %85 = vmatprep.subr.mxu0 0.0
    %86 = vmatpush2.xpose.msra.mxu0 0.0
    %87 = vmatprep.subr.mxu0 0.0
    %88 = vmatpush2.xpose.msra.mxu0 0.0
    %89 = vmatprep.subr.mxu0 0.0
    %90 = vmatpush2.xpose.msra.mxu0 0.0
    %91 = vmatprep.subr.mxu0 0.0
    %92 = vmatpush2.xpose.msra.mxu0 0.0
    %93 = vmatprep.subr.mxu0 0.0
    %94 = vmatpush2.xpose.msra.mxu0 0.0
    %95 = vmatprep.subr.mxu0 0.0
    %96 = vmatpush2.xpose.msra.mxu0 0.0
    %97 = vmatprep.subr.mxu0 0.0
    %98 = vmatpush2.xpose.msra.mxu0 0.0
    %99 = vmatprep.subr.mxu0 0.0
    %100 = vmatpush2.xpose.msra.mxu0 0.0
    %101 = vmatprep.subr.mxu0 0.0
    %102 = vmatpush2.xpose.msra.mxu0 0.0
    %103 = vmatprep.subr.mxu0 0.0
    %104 = vmatpush2.xpose.msra.mxu0 0.0
    %105 = vmatprep.subr.mxu0 0.0
    %106 = vmatpush2.xpose.msra.mxu0 0.0
    %107 = vmatprep.subr.mxu0 0.0
    %108 = vmatpush2.xpose.msra.mxu0 0.0
    %109 = vmatprep.subr.mxu0 0.0
    %110 = vmatpush2.xpose.msra.mxu0 0.0
    %111 = vmatprep.subr.mxu0 0.0
    %112 = vmatpush2.xpose.msra.mxu0 0.0
    %113 = vmatprep.subr.mxu0 0.0
    %114 = vmatpush2.xpose.msra.mxu0 0.0
    %115 = vmatprep.subr.mxu0 0.0
    %116 = vmatpush2.xpose.msra.mxu0 0.0
    %117 = vmatprep.mubr.f32.mxu0 %v50
    %118 = vmatmul.mubr.f32.gmra.mxu0 %v49
    %v119 = vpop.f32.mrf.mxu0
    %v120 = vadd.f32 0.0, %v119
    %v121 = vpop.f32.mrf.mxu0
    %122 = vdwg.mxu0
    %p123 = scmp.eq.s32.totalorder 0, 0
    // Predicated region
    $region26: #{tpu_custom_call.1} parent=1 // pred_check
      %p124 = pneg %p123
    $region27: #{tpu_custom_call.1} parent=1 // pred_check_branch
      %126 = sbr.rel (%p124) target = $region29
    $region28: #{tpu_custom_call.1} parent=1 // pred_region
      %vm127 = vcmask 48128
      %128 = vst.msk [vmem:[#allocation9] sm:$0xff] %vm127, %v120
    $region29: #{tpu_custom_call.1} parent=1 // pred_fallthru
      _
    %p129 = scmp.gt.s32.totalorder 0, 0
    // Predicated region
    $region30: #{tpu_custom_call.1} parent=1 // pred_check
      %p130 = pneg %p129
    $region31: #{tpu_custom_call.1} parent=1 // pred_check_branch
      %132 = sbr.rel (%p130) target = $region33
    $region32: #{tpu_custom_call.1} parent=1 // pred_region
      %v133 = vld [vmem:[#allocation9] sm:$0xff]
      %v134 = vadd.f32 %v133, %v120
      %vm135 = vcmask 48128
      %136 = vst.msk [vmem:[#allocation9] sm:$0xff] %vm135, %v134
    $region33: #{tpu_custom_call.1} parent=1 // pred_fallthru
      _
    // Predicated region
    $region34: #{tpu_custom_call.1} parent=1 // pred_check
      %p137 = pneg %p123
    $region35: #{tpu_custom_call.1} parent=1 // pred_check_branch
      %139 = sbr.rel (%p137) target = $region37
    $region36: #{tpu_custom_call.1} parent=1 // pred_region
      %v140 = vld [vmem:[#allocation9] sm:$0xff]
      %v141 = vld [vmem:[%s3] sm:$0xff]
      %v142 = vld [vmem:[%s4] sm:$0x1]
      %144 = vset.pattern.permute.xlu0 0
      %145 = vperm.xlu0 %144, %v141
      %v146 = vpop.permute.xlu0 %145
      %v149 = vlaneseq
      %v150 = vshrl.u32 %v149, 7
      %v151 = vsub.s32 0, %v150
      %v152 = vrot.slane %v142, %v151
      %v154 = vadd.f32 %v146, %v152
      %v155 = vmul.f32 %v140, 2.0
      %v156 = vsub.f32 %v154, %v155
      %v157 = vmax.f32 %v156, 1e-30
      %s158 = sld [smem:[#allocation3]]
      %s159 = smul.f32 %s158, 2.0
      %s160 = smul.f32 %s159, %s158
      %v161 = vstv %s160
      %v162 = vrcp.pop %v161
      %s163 = vtos %v162
      %s164 = smul.f32 -1.0, %s163
      %v165 = vstv %s164
      %v166 = vmul.f32 %v165, %v157
      %v167 = vmul.f32 %v166, 1.442695
      %v168 = vpow.pop %v167
      %s169 = sld [smem:[#allocation3 + $0x1]]
      %s170 = smul.f32 %s169, 2.0
      %s171 = smul.f32 %s170, %s169
      %v172 = vstv %s171
      %v173 = vrcp.pop %v172
      %s174 = vtos %v173
      %s175 = smul.f32 -1.0, %s174
      %v176 = vstv %s175
      %v177 = vmul.f32 %v176, %v157
      %v178 = vmul.f32 %v177, 1.442695
      %v179 = vpow.pop %v178
      %v180 = vadd.f32 %v168, %v179
      %v181 = vmul.f32 %v180, 0.5
      %vm182 = vcmask 48128
      %183 = vst.msk [vmem:[#allocation9] sm:$0xff] %vm182, %v181
    $region37: #{tpu_custom_call.1} parent=1 // pred_fallthru
      _
    // Predicated region
    $region38: #{tpu_custom_call.1} parent=1 // pred_check
      _
    $region39: #{tpu_custom_call.1} parent=1 // pred_check_branch
      %185 = sbr.rel (0) target = $region41
    $region40: #{tpu_custom_call.1} parent=1 // pred_region
      %s187 = ssub.s32 128, 128
      %188 = vsyncadd [#allocation6], %s187
      %s190 = sshll.u32 [#allocation9], 4
      %s191 = int_to_ptr.vmem [resolvable:$true] %s190
      %193 = dma.vmem_to_hbm [thread:$0]  %s191, 128, %s5, [#allocation6]
    $region41: #{tpu_custom_call.1} parent=1 // pred_fallthru
      _
    // Predicated region
    $region42: #{tpu_custom_call.1} parent=1 // pred_check
      _
    $region43: #{tpu_custom_call.1} parent=1 // pred_check_branch
      %195 = sbr.rel (0) target = $region45
    $region44: #{tpu_custom_call.1} parent=1 // pred_region
      %196 = dma.done [#allocation6], 128
    $region45: #{tpu_custom_call.1} parent=1 // pred_fallthru
      _
    %197 = vsyncpa [#allocation5], 1
    %198 = vsyncpa [#allocation8], 1
    %199 = vsyncpa [#allocation6], 1

</llo_original>
